<compile_context>
chip_gen: v5e
topology: v5e:2x2
jax: 0.10.0
libtpu: 0.0.40
codegen_flags: <defaults>
</compile_context>

<pallas_src>
import functools

import jax
import jax.numpy as jnp
from jax.experimental import pallas as pl
from jax.experimental.pallas import tpu as pltpu


def poly_cutoff_kernel(x_ref, o_ref, *, cutoff: float):
    """Elementwise polynomial cutoff on one (tm, ln) VMEM tile."""
    x = x_ref[...]
    c = jnp.asarray(cutoff, dtype=x.dtype)
    d4 = jnp.asarray((0.25 * cutoff) ** 4, dtype=x.dtype)  # (cutoff/4)^4, baked in

    mask = x < c
    xm = jnp.where(mask, x, jnp.zeros_like(x))   # x * mask
    xr = xm - c
    xr2 = xr * xr
    xr4 = xr2 * xr2                              # (x*mask - cutoff)^4
    out = xr4 / (d4 + xr4)
    o_ref[...] = jnp.where(mask, out, jnp.zeros_like(out))   # out * mask


def _round_up(a: int, b: int) -> int:
    return ((a + b - 1) // b) * b


def polynomial_cutoff(x: jax.Array, cutoff: float = 10.0, *,
                      lane_block: int = 1024,
                      max_row_block: int = 512) -> jax.Array:
    """Applies the polynomial cutoff elementwise to an arbitrarily-shaped array."""
    orig_shape = x.shape
    total = int(x.size)

    # --- flatten to a lane-dense 2-D slab: (rows, lane_block) ---
    ln = lane_block                                  # multiple of 128 (lane-dense)
    rows = _round_up(max(total, 1), ln) // ln
    rows = _round_up(max(rows, 8), 8)                # sublane-aligned row count

    # --- row tile: multiple of 8, capped at max_row_block; split into >= 2
    #     "parallel" grid blocks when enough rows exist (v7x megacore) ---
    tm = min(max_row_block, rows)
    if rows >= 16 and tm == rows:
        tm = max(8, ((rows // 2) // 8) * 8)
    rows = _round_up(rows, tm)                       # full blocks only
    padded = rows * ln
    grid_m = rows // tm

    flat = x.reshape(-1)
    if padded != total:
        flat = jnp.pad(flat, (0, padded - total))
    x2 = flat.reshape(rows, ln)

    out2 = pl.pallas_call(
        functools.partial(poly_cutoff_kernel, cutoff=float(cutoff)),
        out_shape=jax.ShapeDtypeStruct((rows, ln), x2.dtype),
        grid=(grid_m,),
        in_specs=[pl.BlockSpec((tm, ln), lambda i: (i, 0))],
        out_specs=pl.BlockSpec((tm, ln), lambda i: (i, 0)),
        compiler_params=pltpu.CompilerParams(
            dimension_semantics=("parallel",),
            vmem_limit_bytes=32 * 1024 * 1024,       # safe on v5e/v6e/v7x
        ),
    )(x2)

    return out2.reshape(-1)[:total].reshape(orig_shape)


def polynomial_cutoff_ref(x: jax.Array, cutoff: float = 10.0) -> jax.Array:
    """Pure-JAX reference mirroring the PyTorch forward exactly."""
    c = jnp.asarray(cutoff, dtype=x.dtype)
    mask = (x < c).astype(x.dtype)
    xm = x * mask
    d = c * 0.25
    xr4 = jnp.power(xm - c, 4)
    out = xr4 / (d ** 4 + xr4)
    return out * mask


if __name__ == "__main__":
    key = jax.random.PRNGKey(0)
    # Small 4-D "distance" tensor; values in [0, 2*cutoff) so both branches hit.
    x = jax.random.uniform(key, (2, 4, 16, 16), dtype=jnp.float32) * 20.0

    out = polynomial_cutoff(x, cutoff=10.0)
    out = jax.block_until_ready(out)

    ref = polynomial_cutoff_ref(x, cutoff=10.0)
    assert out.shape == ref.shape and out.dtype == ref.dtype
    assert jnp.allclose(out, ref, rtol=1e-6, atol=1e-6), "mismatch vs reference"

    print("KERNEL_OK")
</pallas_src>

<mosaic_0001>
module attributes {stable_mosaic.version = 11 : i64} {
  func.func @poly_cutoff_kernel(%arg0: i32, %arg1: memref<8x1024xf32, #tpu.memory_space<vmem>>, %arg2: memref<8x1024xf32, #tpu.memory_space<vmem>>) attributes {dimension_semantics = [#tpu.dimension_semantics<parallel>], iteration_bounds = array<i64: 1>, scalar_prefetch = 0 : i64, scratch_operands = 0 : i64, tpu.core_type = #tpu.core_type<tc>, window_params = [{transform_indices = @transform_0, window_bounds = array<i64: 8, 1024>}, {transform_indices = @transform_1, window_bounds = array<i64: 8, 1024>}]} {
    %c0 = arith.constant 0 : index
    %c0_0 = arith.constant 0 : index
    %0 = vector.load %arg1[%c0, %c0_0] : memref<8x1024xf32, #tpu.memory_space<vmem>>, vector<8x1024xf32>
    %cst = arith.constant 1.000000e+01 : f32
    %1 = vector.broadcast %cst : f32 to vector<8x1024xf32>
    %2 = arith.cmpf olt, %0, %1 : vector<8x1024xf32>
    %cst_1 = arith.constant 0.000000e+00 : f32
    %3 = vector.broadcast %cst_1 : f32 to vector<8x1024xf32>
    %4 = arith.select %2, %0, %3 : vector<8x1024xi1>, vector<8x1024xf32>
    %cst_2 = arith.constant 1.000000e+01 : f32
    %5 = vector.broadcast %cst_2 : f32 to vector<8x1024xf32>
    %6 = arith.subf %4, %5 : vector<8x1024xf32>
    %7 = arith.mulf %6, %6 : vector<8x1024xf32>
    %8 = arith.mulf %7, %7 : vector<8x1024xf32>
    %cst_3 = arith.constant 3.906250e+01 : f32
    %9 = vector.broadcast %cst_3 : f32 to vector<8x1024xf32>
    %10 = arith.addf %9, %8 : vector<8x1024xf32>
    %11 = arith.divf %8, %10 : vector<8x1024xf32>
    %cst_4 = arith.constant 0.000000e+00 : f32
    %12 = vector.broadcast %cst_4 : f32 to vector<8x1024xf32>
    %13 = arith.select %2, %11, %12 : vector<8x1024xi1>, vector<8x1024xf32>
    %c0_5 = arith.constant 0 : index
    %c0_6 = arith.constant 0 : index
    %14 = vector.load %arg2[%c0_5, %c0_6] : memref<8x1024xf32, #tpu.memory_space<vmem>>, vector<8x1024xf32>
    tpu.vector_store %arg2[%c0_5, %c0_6], %13 {strides = array<i32>} : memref<8x1024xf32, #tpu.memory_space<vmem>>, vector<8x1024xf32>,
    return
  }
  func.func @transform_0(%arg0: i32) -> (i32, i32) {
    %c0_i32 = arith.constant 0 : i32
    %c0_i32_0 = arith.constant 0 : i32
    return %arg0, %c0_i32 : i32, i32
  }
  func.func @transform_1(%arg0: i32) -> (i32, i32) {
    %c0_i32 = arith.constant 0 : i32
    %c0_i32_0 = arith.constant 0 : i32
    return %arg0, %c0_i32 : i32, i32
  }
}

</mosaic_0001>

<llo_original>
// kernel: tpu_custom_call.1
$region0: #{tpu_custom_call.1}
  #allocation0 [shape = 'u32[]', space=smem, size = 0x4, offset = 0x4, fixed_abs, tag = 'smem constant byte address 0x4 - core index']
  #allocation1 [shape = 'u32[72,128]{1,0:T(1,128)}', space=vmem, size = 0x9000, scoped, tag = 'internal scratch']
  %s0 = inlined_call_operand.hbm [shape: f32[8,1024], index: 0, kind: input, shape index: {}]
  %s1 = inlined_call_operand.hbm [shape: f32[8,1024], index: 1, kind: output, shape index: {}]
  %s2 = sld [smem:[#allocation0]]
  $region18: #{tpu_custom_call.1} parent=0
    _
  %s4 = ssub.s32 1, %s2
  %s5 = scalar_select 0, %s4, %s2
  $region1: #{tpu_custom_call.1} parent=0
    #allocation2 [shape = 'u8[32768]{0}', space=vmem, size = 0x8000, scoped, tag = 'input window, operand 0, single buffered']
    #allocation3 [shape = 's32[1]{0}', space=sflag, size = 0x4, scoped, tag = 'scoped memory for tpu_custom_call.1']
    #allocation4 [shape = 's32[1]{0}', space=sflag, size = 0x4, scoped, tag = 'scoped memory for tpu_custom_call.1']
    #allocation5 [shape = 'u8[32768]{0}', space=vmem, size = 0x8000, scoped, tag = 'output window, operand 0, single buffered']
    %6 = vsyncpa [#allocation3], 0
    %7 = vsyncpa [#allocation4], 0
    // Predicated region
    $region2: #{tpu_custom_call.1} parent=1 // pred_check
      _
    $region3: #{tpu_custom_call.1} parent=1 // pred_check_branch
      %9 = sbr.rel (0) target = $region5
    $region4: #{tpu_custom_call.1} parent=1 // pred_region
      %11 = vsyncadd [#allocation3], 0
      %s13 = sshll.u32 %s0, 4
      %s14 = int_to_ptr.hbm [resolvable:$true] %s13
      %s15 = sshll.u32 [#allocation2], 4
      %s16 = int_to_ptr.vmem [resolvable:$true] %s15
      %18 = dma.hbm_to_vmem [thread:$0]  %s14, 1024, %s16, [#allocation3]
    $region5: #{tpu_custom_call.1} parent=1 // pred_fallthru
      _
    // Predicated region
    $region6: #{tpu_custom_call.1} parent=1 // pred_check
      _
    $region7: #{tpu_custom_call.1} parent=1 // pred_check_branch
      %20 = sbr.rel (0) target = $region9
    $region8: #{tpu_custom_call.1} parent=1 // pred_region
      %22 = dma.done [#allocation3], 1024
    $region9: #{tpu_custom_call.1} parent=1 // pred_fallthru
      _
    %v23 = vld [vmem:[#allocation2] sm:$0xff]
    %v24 = vld [vmem:[#allocation2 + $0x8] sm:$0xff]
    %v25 = vld [vmem:[#allocation2 + $0x10] sm:$0xff]
    %v26 = vld [vmem:[#allocation2 + $0x18] sm:$0xff]
    %v27 = vld [vmem:[#allocation2 + $0x20] sm:$0xff]
    %v28 = vld [vmem:[#allocation2 + $0x28] sm:$0xff]
    %v29 = vld [vmem:[#allocation2 + $0x30] sm:$0xff]
    %v30 = vld [vmem:[#allocation2 + $0x38] sm:$0xff]
    %vm31 = vcmp.lt.f32.partialorder %v23, 10.0
    %vm32 = vcmp.lt.f32.partialorder %v24, 10.0
    %vm33 = vcmp.lt.f32.partialorder %v25, 10.0
    %vm34 = vcmp.lt.f32.partialorder %v26, 10.0
    %vm35 = vcmp.lt.f32.partialorder %v27, 10.0
    %vm36 = vcmp.lt.f32.partialorder %v28, 10.0
    %vm37 = vcmp.lt.f32.partialorder %v29, 10.0
    %vm38 = vcmp.lt.f32.partialorder %v30, 10.0
    %v39 = vsel %vm31, %v23, 0.0
    %v40 = vsel %vm32, %v24, 0.0
    %v41 = vsel %vm33, %v25, 0.0
    %v42 = vsel %vm34, %v26, 0.0
    %v43 = vsel %vm35, %v27, 0.0
    %v44 = vsel %vm36, %v28, 0.0
    %v45 = vsel %vm37, %v29, 0.0
    %v46 = vsel %vm38, %v30, 0.0
    %v47 = vsub.f32 %v39, 10.0
    %v48 = vsub.f32 %v40, 10.0
    %v49 = vsub.f32 %v41, 10.0
    %v50 = vsub.f32 %v42, 10.0
    %v51 = vsub.f32 %v43, 10.0
    %v52 = vsub.f32 %v44, 10.0
    %v53 = vsub.f32 %v45, 10.0
    %v54 = vsub.f32 %v46, 10.0
    %v55 = vmul.f32 %v47, %v47
    %v56 = vmul.f32 %v48, %v48
    %v57 = vmul.f32 %v49, %v49
    %v58 = vmul.f32 %v50, %v50
    %v59 = vmul.f32 %v51, %v51
    %v60 = vmul.f32 %v52, %v52
    %v61 = vmul.f32 %v53, %v53
    %v62 = vmul.f32 %v54, %v54
    %v63 = vmul.f32 %v55, %v55
    %v64 = vmul.f32 %v56, %v56
    %v65 = vmul.f32 %v57, %v57
    %v66 = vmul.f32 %v58, %v58
    %v67 = vmul.f32 %v59, %v59
    %v68 = vmul.f32 %v60, %v60
    %v69 = vmul.f32 %v61, %v61
    %v70 = vmul.f32 %v62, %v62
    %v71 = vadd.f32 %v63, 39.0625
    %v72 = vadd.f32 %v64, 39.0625
    %v73 = vadd.f32 %v65, 39.0625
    %v74 = vadd.f32 %v66, 39.0625
    %v75 = vadd.f32 %v67, 39.0625
    %v76 = vadd.f32 %v68, 39.0625
    %v77 = vadd.f32 %v69, 39.0625
    %v78 = vadd.f32 %v70, 39.0625
    %v79 = vrcp.pop %v71
    %v80 = vmul.f32 %v71, %v79
    %v81 = vsub.f32 1.0, %v80
    %v82 = vmul.f32 %v79, %v81
    %v83 = vadd.f32 %v79, %v82
    %vm84 = vweird.f32 %v71
    %vm85 = vweird.f32 %v79
    %vm86 = vmor %vm84, %vm85
    %v87 = vsel %vm86, %v79, %v83
    %v88 = vand.u32 2147483647, %v71
    %vm89 = vcmp.eq.f32.partialorder %v88, 8.507059e+37
    %v90 = vand.u32 %v71, 2147483648
    %v91 = vor.u32 1.1754944e-38, %v90
    %v92 = vsel %vm89, %v91, %v87
    %v93 = vmul.f32 %v63, %v92
    %v94 = vrcp.pop %v72
    %v95 = vmul.f32 %v72, %v94
    %v96 = vsub.f32 1.0, %v95
    %v97 = vmul.f32 %v94, %v96
    %v98 = vadd.f32 %v94, %v97
    %vm99 = vweird.f32 %v72
    %vm100 = vweird.f32 %v94
    %vm101 = vmor %vm99, %vm100
    %v102 = vsel %vm101, %v94, %v98
    %v103 = vand.u32 2147483647, %v72
    %vm104 = vcmp.eq.f32.partialorder %v103, 8.507059e+37
    %v105 = vand.u32 %v72, 2147483648
    %v106 = vor.u32 1.1754944e-38, %v105
    %v107 = vsel %vm104, %v106, %v102
    %v108 = vmul.f32 %v64, %v107
    %v109 = vrcp.pop %v73
    %v110 = vmul.f32 %v73, %v109
    %v111 = vsub.f32 1.0, %v110
    %v112 = vmul.f32 %v109, %v111
    %v113 = vadd.f32 %v109, %v112
    %vm114 = vweird.f32 %v73
    %vm115 = vweird.f32 %v109
    %vm116 = vmor %vm114, %vm115
    %v117 = vsel %vm116, %v109, %v113
    %v118 = vand.u32 2147483647, %v73
    %vm119 = vcmp.eq.f32.partialorder %v118, 8.507059e+37
    %v120 = vand.u32 %v73, 2147483648
    %v121 = vor.u32 1.1754944e-38, %v120
    %v122 = vsel %vm119, %v121, %v117
    %v123 = vmul.f32 %v65, %v122
    %v124 = vrcp.pop %v74
    %v125 = vmul.f32 %v74, %v124
    %v126 = vsub.f32 1.0, %v125
    %v127 = vmul.f32 %v124, %v126
    %v128 = vadd.f32 %v124, %v127
    %vm129 = vweird.f32 %v74
    %vm130 = vweird.f32 %v124
    %vm131 = vmor %vm129, %vm130
    %v132 = vsel %vm131, %v124, %v128
    %v133 = vand.u32 2147483647, %v74
    %vm134 = vcmp.eq.f32.partialorder %v133, 8.507059e+37
    %v135 = vand.u32 %v74, 2147483648
    %v136 = vor.u32 1.1754944e-38, %v135
    %v137 = vsel %vm134, %v136, %v132
    %v138 = vmul.f32 %v66, %v137
    %v139 = vrcp.pop %v75
    %v140 = vmul.f32 %v75, %v139
    %v141 = vsub.f32 1.0, %v140
    %v142 = vmul.f32 %v139, %v141
    %v143 = vadd.f32 %v139, %v142
    %vm144 = vweird.f32 %v75
    %vm145 = vweird.f32 %v139
    %vm146 = vmor %vm144, %vm145
    %v147 = vsel %vm146, %v139, %v143
    %v148 = vand.u32 2147483647, %v75
    %vm149 = vcmp.eq.f32.partialorder %v148, 8.507059e+37
    %v150 = vand.u32 %v75, 2147483648
    %v151 = vor.u32 1.1754944e-38, %v150
    %v152 = vsel %vm149, %v151, %v147
    %v153 = vmul.f32 %v67, %v152
    %v154 = vrcp.pop %v76
    %v155 = vmul.f32 %v76, %v154
    %v156 = vsub.f32 1.0, %v155
    %v157 = vmul.f32 %v154, %v156
    %v158 = vadd.f32 %v154, %v157
    %vm159 = vweird.f32 %v76
    %vm160 = vweird.f32 %v154
    %vm161 = vmor %vm159, %vm160
    %v162 = vsel %vm161, %v154, %v158
    %v163 = vand.u32 2147483647, %v76
    %vm164 = vcmp.eq.f32.partialorder %v163, 8.507059e+37
    %v165 = vand.u32 %v76, 2147483648
    %v166 = vor.u32 1.1754944e-38, %v165
    %v167 = vsel %vm164, %v166, %v162
    %v168 = vmul.f32 %v68, %v167
    %v169 = vrcp.pop %v77
    %v170 = vmul.f32 %v77, %v169
    %v171 = vsub.f32 1.0, %v170
    %v172 = vmul.f32 %v169, %v171
    %v173 = vadd.f32 %v169, %v172
    %vm174 = vweird.f32 %v77
    %vm175 = vweird.f32 %v169
    %vm176 = vmor %vm174, %vm175
    %v177 = vsel %vm176, %v169, %v173
    %v178 = vand.u32 2147483647, %v77
    %vm179 = vcmp.eq.f32.partialorder %v178, 8.507059e+37
    %v180 = vand.u32 %v77, 2147483648
    %v181 = vor.u32 1.1754944e-38, %v180
    %v182 = vsel %vm179, %v181, %v177
    %v183 = vmul.f32 %v69, %v182
    %v184 = vrcp.pop %v78
    %v185 = vmul.f32 %v78, %v184
    %v186 = vsub.f32 1.0, %v185
    %v187 = vmul.f32 %v184, %v186
    %v188 = vadd.f32 %v184, %v187
    %vm189 = vweird.f32 %v78
    %vm190 = vweird.f32 %v184
    %vm191 = vmor %vm189, %vm190
    %v192 = vsel %vm191, %v184, %v188
    %v193 = vand.u32 2147483647, %v78
    %vm194 = vcmp.eq.f32.partialorder %v193, 8.507059e+37
    %v195 = vand.u32 %v78, 2147483648
    %v196 = vor.u32 1.1754944e-38, %v195
    %v197 = vsel %vm194, %v196, %v192
    %v198 = vmul.f32 %v70, %v197
    %v199 = vsel %vm31, %v93, 0.0
    %v200 = vsel %vm32, %v108, 0.0
    %v201 = vsel %vm33, %v123, 0.0
    %v202 = vsel %vm34, %v138, 0.0
    %v203 = vsel %vm35, %v153, 0.0
    %v204 = vsel %vm36, %v168, 0.0
    %v205 = vsel %vm37, %v183, 0.0
    %v206 = vsel %vm38, %v198, 0.0
    %207 = vst [vmem:[#allocation5] sm:$0xff] %v199
    %208 = vst [vmem:[#allocation5 + $0x8] sm:$0xff] %v200
    %209 = vst [vmem:[#allocation5 + $0x10] sm:$0xff] %v201
    %210 = vst [vmem:[#allocation5 + $0x18] sm:$0xff] %v202
    %211 = vst [vmem:[#allocation5 + $0x20] sm:$0xff] %v203
    %212 = vst [vmem:[#allocation5 + $0x28] sm:$0xff] %v204
    %213 = vst [vmem:[#allocation5 + $0x30] sm:$0xff] %v205
    %214 = vst [vmem:[#allocation5 + $0x38] sm:$0xff] %v206
    // Predicated region
    $region10: #{tpu_custom_call.1} parent=1 // pred_check
      _
    $region11: #{tpu_custom_call.1} parent=1 // pred_check_branch
      %216 = sbr.rel (0) target = $region13
    $region12: #{tpu_custom_call.1} parent=1 // pred_region
      %218 = vsyncadd [#allocation4], 0
      %s220 = sshll.u32 [#allocation5], 4
      %s221 = int_to_ptr.vmem [resolvable:$true] %s220
      %s222 = sshll.u32 %s1, 4
      %s223 = int_to_ptr.hbm [resolvable:$true] %s222
      %225 = dma.vmem_to_hbm [thread:$0]  %s221, 1024, %s223, [#allocation4]
    $region13: #{tpu_custom_call.1} parent=1 // pred_fallthru
      _
    // Predicated region
    $region14: #{tpu_custom_call.1} parent=1 // pred_check
      _
    $region15: #{tpu_custom_call.1} parent=1 // pred_check_branch
      %227 = sbr.rel (0) target = $region17
    $region16: #{tpu_custom_call.1} parent=1 // pred_region
      %229 = dma.done [#allocation4], 1024
    $region17: #{tpu_custom_call.1} parent=1 // pred_fallthru
      _
    %230 = vsyncpa [#allocation3], 1
    %231 = vsyncpa [#allocation4], 1

</llo_original>
